<compile_context>
chip_gen: v7x
topology: tpu7x:2x2x1
jax: 0.10.0
libtpu: 0.0.40
codegen_flags: <defaults>
</compile_context>

<pallas_src>
import functools

import jax
import jax.numpy as jnp
from jax import lax
from jax.experimental import pallas as pl
from jax.experimental.pallas import tpu as pltpu


def _ceil_to(v, m):
    return ((v + m - 1) // m) * m


def _pick_block_rows(n, d, itemsize):
    # ~16 MiB of double-buffered input per pipeline: fits every generation's scoped
    # VMEM (v7x 64 MiB physical) with room for the resident (D, D) f32 accumulator.
    budget_rows = (16 * 1024 * 1024) // max(2 * d * itemsize, 1)
    bn = min(_ceil_to(n, 8), max(budget_rows, 8), 8192)
    if bn >= 512:
        bn = (bn // 512) * 512        # MXU-friendly contraction depth (mult. of 128/256)
    elif bn >= 128:
        bn = (bn // 128) * 128
    else:
        bn = _ceil_to(bn, 8)
    bn = max(bn, 8)
    if bn >= n:
        bn = n                        # single full-extent tile (always a legal block)
    return bn


def _partial_cov_kernel(x_ref, pivot_ref, gram_ref, sum_ref, *,
                        n_rows, block_rows, tiles_per_core):
    """Per-core streaming statistics of pivot-shifted rows:
         gram_ref <- sum_i (x_i - p)(x_i - p)^T   (f32)
         sum_ref  <- sum_i (x_i - p)              (f32)
       Rows past n_rows (partial / fully out-of-range tiles) are masked to exact 0."""
    c = pl.program_id(0)
    t = pl.program_id(1)

    row_start = (c * tiles_per_core + t) * block_rows
    row_ids = row_start + lax.broadcasted_iota(jnp.int32, (block_rows, 1), 0)
    valid = row_ids < n_rows

    # Mask is mandatory: the last (and any clamped fully-OOB) tile reads unspecified
    # rows; select forces them to contribute exactly nothing.
    xm = jnp.where(valid, x_ref[...] - pivot_ref[...], 0)

    # Gram update: contract over the row (batch) axis directly on the MXU.
    g = lax.dot_general(xm, xm,
                        dimension_numbers=(((0,), (0,)), ((), ())),
                        preferred_element_type=jnp.float32)
    s = jnp.sum(xm.astype(jnp.float32), axis=0, keepdims=True)

    @pl.when(t == 0)
    def _init_with_first():           # fold zero-init into the first step
        gram_ref[...] = g
        sum_ref[...] = s

    @pl.when(t != 0)
    def _accumulate():
        gram_ref[...] += g
        sum_ref[...] += s


class MahalanobisLayer:
    def __init__(self, dim=300):
        # Mirrors register_buffer('S'/'S_inv', eye(dim)); forward() recomputes S_inv,
        # so these do not affect the returned value.
        self.S = jnp.eye(dim, dtype=jnp.float32)
        self.S_inv = jnp.eye(dim, dtype=jnp.float32)

    def __call__(self, x):
        x = jnp.asarray(x)
        if x.dtype not in (jnp.float32, jnp.bfloat16):
            x = x.astype(jnp.float32)
        N, D = x.shape
        itemsize = jnp.dtype(x.dtype).itemsize

        bn = _pick_block_rows(N, D, itemsize)
        total_tiles = -(-N // bn)
        num_cores = 2 if total_tiles >= 2 else 1      # "parallel" axis: 2x on v7x,
        tiles_per_core = -(-total_tiles // num_cores)  # ~free on single-TC v5e/v6e

        # Numerical pivot (first row); covariance is shift-invariant so it cancels
        # exactly in the finalize but keeps the single-pass Gram well conditioned.
        pivot = lax.slice(x, (0, 0), (1, D))

        # Double-buffered input + pivot + resident per-core (D,D)/(1,D) f32 outputs.
        # TODO(synk): for very large D (>~2048) tile the output columns instead of
        # holding the full (D, D) accumulator resident (v7x has only 64 MiB VMEM).
        need = (2 * bn * D * itemsize + 2 * D * itemsize
                + 2 * D * D * 4 + 2 * D * 4)
        vmem_bytes = min(max(int(need * 1.5) + (4 << 20), 32 << 20), 96 << 20)

        gram_p, sum_p = pl.pallas_call(
            functools.partial(_partial_cov_kernel, n_rows=N, block_rows=bn,
                              tiles_per_core=tiles_per_core),
            out_shape=(jax.ShapeDtypeStruct((num_cores, D, D), jnp.float32),
                       jax.ShapeDtypeStruct((num_cores, 1, D), jnp.float32)),
            grid_spec=pltpu.PrefetchScalarGridSpec(
                num_scalar_prefetch=0,
                grid=(num_cores, tiles_per_core),
                in_specs=[
                    # Full feature extent in the block (no host padding); clamp the
                    # row-block index so a fully out-of-range tile (odd tile split)
                    # never issues an OOB DMA — its rows are masked in-kernel anyway.
                    pl.BlockSpec(
                        (bn, D),
                        lambda c, t: (jnp.minimum(c * tiles_per_core + t,
                                                  total_tiles - 1), 0)),
                    pl.BlockSpec((1, D), lambda c, t: (0, 0)),
                ],
                out_specs=[
                    pl.BlockSpec((None, D, D), lambda c, t: (c, 0, 0)),
                    pl.BlockSpec((None, 1, D), lambda c, t: (c, 0, 0)),
                ],
            ),
            compiler_params=pltpu.CompilerParams(
                dimension_semantics=("parallel", "arbitrary"),
                vmem_limit_bytes=int(vmem_bytes),
            ),
        )(x, pivot)

        # Combine per-core partials + finalize (tiny D x D work) in plain XLA.
        gram = jnp.sum(gram_p, axis=0)                    # (D, D) f32
        s = jnp.sum(sum_p, axis=0)                        # (1, D) f32
        # cov(delta) == cov(x - pivot) = (G - s s^T / N) / (N - 1)
        cov = (gram - (s.T @ s) / N) / (N - 1)

        # TODO(synk): pseudo-inverse (SVD) has no clean Pallas equivalent; plain JAX.
        s_inv = jnp.linalg.pinv(cov)
        self.S_inv = s_inv  # NOTE: Python side effect; stores a tracer under jit.

        # Trace identity: mean(diag(delta @ S_inv @ delta^T))
        #   = trace(S_inv @ delta^T delta) / N = (N-1)/N * sum(S_inv * cov).
        return jnp.sum(s_inv * cov) * ((N - 1) / N)


def _reference(x):
    # Faithful to the PyTorch forward (including the +1e-10 re-centered cov).
    x = x.astype(jnp.float32)
    delta = x - jnp.mean(x, axis=0, keepdims=True)
    t = delta + 1e-10
    t = t - jnp.mean(t, axis=0, keepdims=True)
    cov = (t.T @ t) / (x.shape[0] - 1)
    s_inv = jnp.linalg.pinv(cov)
    m = delta @ s_inv @ delta.T
    return jnp.mean(jnp.diag(m))


if __name__ == "__main__":
    N, D = 64, 32  # batch of 64 encodings, dim=32
    key = jax.random.PRNGKey(0)
    x = jax.random.normal(key, (N, D), dtype=jnp.float32)

    layer = MahalanobisLayer(dim=D)
    out = jax.block_until_ready(layer(x))

    ref = jax.block_until_ready(_reference(x))
    assert jnp.allclose(out, ref, rtol=1e-3, atol=1e-3), (out, ref)

    print("KERNEL_OK")
</pallas_src>

<mosaic_0001>
module attributes {stable_mosaic.version = 11 : i64} {
  func.func @_partial_cov_kernel(%arg0: i32, %arg1: i32, %arg2: memref<64x32xf32, #tpu.memory_space<vmem>>, %arg3: memref<1x32xf32, #tpu.memory_space<vmem>>, %arg4: memref<1x32x32xf32, #tpu.memory_space<vmem>>, %arg5: memref<1x1x32xf32, #tpu.memory_space<vmem>>) attributes {dimension_semantics = [#tpu.dimension_semantics<parallel>, #tpu.dimension_semantics<arbitrary>], iteration_bounds = array<i64: 1, 1>, scalar_prefetch = 0 : i64, scratch_operands = 0 : i64, tpu.core_type = #tpu.core_type<tc>, window_params = [{transform_indices = @transform_0, window_bounds = array<i64: 64, 32>}, {pipeline_mode = #tpu.pipeline_mode<synchronous>, transform_indices = @transform_1, window_bounds = array<i64: 1, 32>}, {transform_indices = @transform_2, window_bounds = array<i64: 1, 32, 32>}, {transform_indices = @transform_3, window_bounds = array<i64: 1, 1, 32>}]} {
    %c1_i32 = arith.constant 1 : i32
    %0 = arith.muli %arg0, %c1_i32 : i32
    %1 = arith.addi %0, %arg1 : i32
    %c64_i32 = arith.constant 64 : i32
    %2 = arith.muli %1, %c64_i32 : i32
    %3 = tpu.iota {dimensions = array<i32: 0>} : vector<64x1xi32>
    %4 = vector.broadcast %2 : i32 to vector<64x1xi32>
    %5 = arith.addi %4, %3 : vector<64x1xi32>
    %c64_i32_0 = arith.constant 64 : i32
    %6 = vector.broadcast %c64_i32_0 : i32 to vector<64x1xi32>
    %7 = arith.cmpi slt, %5, %6 : vector<64x1xi32>
    %c0 = arith.constant 0 : index
    %c0_1 = arith.constant 0 : index
    %8 = vector.load %arg2[%c0, %c0_1] : memref<64x32xf32, #tpu.memory_space<vmem>>, vector<64x32xf32>
    %c0_2 = arith.constant 0 : index
    %c0_3 = arith.constant 0 : index
    %9 = vector.load %arg3[%c0_2, %c0_3] : memref<1x32xf32, #tpu.memory_space<vmem>>, vector<1x32xf32>
    %10 = vector.broadcast %9 : vector<1x32xf32> to vector<64x32xf32>
    %11 = arith.subf %8, %10 : vector<64x32xf32>
    %c0_i32 = arith.constant 0 : i32
    %12 = arith.sitofp %c0_i32 : i32 to f32
    %13 = vector.shape_cast %7 : vector<64x1xi1> to vector<64x1xi1>
    %14 = vector.broadcast %13 : vector<64x1xi1> to vector<64x32xi1>
    %15 = vector.broadcast %12 : f32 to vector<64x32xf32>
    %16 = arith.select %14, %11, %15 : vector<64x32xi1>, vector<64x32xf32>
    %cst = arith.constant dense<0.000000e+00> : vector<32x32xf32>
    %17 = tpu.matmul %16, %16, %cst {dimension_numbers = #tpu.dot_dimension_numbers<[0], [0], [1], [1], [0, 1, 1, 1], [], []>} : vector<64x32xf32>, vector<64x32xf32>, vector<32x32xf32> -> vector<32x32xf32>
    %cst_4 = arith.constant dense<0.000000e+00> : vector<32xf32>
    %18 = vector.multi_reduction <add>, %16, %cst_4 [0] : vector<64x32xf32> to vector<32xf32>
    %19 = vector.shape_cast %18 : vector<32xf32> to vector<1x32xf32>
    %c0_i32_5 = arith.constant 0 : i32
    %20 = arith.cmpi eq, %arg1, %c0_i32_5 : i32
    %21 = arith.extui %20 : i1 to i32
    %c0_i32_6 = arith.constant 0 : i32
    %22 = arith.cmpi ne, %21, %c0_i32_6 : i32
    scf.if %22 {
      %c0_9 = arith.constant 0 : index
      %c0_10 = arith.constant 0 : index
      %c0_11 = arith.constant 0 : index
      %26 = vector.load %arg4[%c0_9, %c0_10, %c0_11] : memref<1x32x32xf32, #tpu.memory_space<vmem>>, vector<1x32x32xf32>
      %27 = vector.shape_cast %26 : vector<1x32x32xf32> to vector<32x32xf32>
      %28 = vector.shape_cast %17 : vector<32x32xf32> to vector<1x32x32xf32>
      tpu.vector_store %arg4[%c0_9, %c0_10, %c0_11], %28 {strides = array<i32>} : memref<1x32x32xf32, #tpu.memory_space<vmem>>, vector<1x32x32xf32>,
      %c0_12 = arith.constant 0 : index
      %c0_13 = arith.constant 0 : index
      %c0_14 = arith.constant 0 : index
      %29 = vector.load %arg5[%c0_12, %c0_13, %c0_14] : memref<1x1x32xf32, #tpu.memory_space<vmem>>, vector<1x1x32xf32>
      %30 = vector.shape_cast %29 : vector<1x1x32xf32> to vector<1x32xf32>
      %31 = vector.shape_cast %19 : vector<1x32xf32> to vector<1x1x32xf32>
      tpu.vector_store %arg5[%c0_12, %c0_13, %c0_14], %31 {strides = array<i32>} : memref<1x1x32xf32, #tpu.memory_space<vmem>>, vector<1x1x32xf32>,
    } else {
    }
    %c0_i32_7 = arith.constant 0 : i32
    %23 = arith.cmpi ne, %arg1, %c0_i32_7 : i32
    %24 = arith.extui %23 : i1 to i32
    %c0_i32_8 = arith.constant 0 : i32
    %25 = arith.cmpi ne, %24, %c0_i32_8 : i32
    scf.if %25 {
      %c0_9 = arith.constant 0 : index
      %c0_10 = arith.constant 0 : index
      %c0_11 = arith.constant 0 : index
      %26 = vector.load %arg4[%c0_9, %c0_10, %c0_11] : memref<1x32x32xf32, #tpu.memory_space<vmem>>, vector<1x32x32xf32>
      %27 = vector.shape_cast %26 : vector<1x32x32xf32> to vector<32x32xf32>
      %28 = arith.addf %27, %17 : vector<32x32xf32>
      %c0_12 = arith.constant 0 : index
      %c0_13 = arith.constant 0 : index
      %c0_14 = arith.constant 0 : index
      %29 = vector.load %arg4[%c0_12, %c0_13, %c0_14] : memref<1x32x32xf32, #tpu.memory_space<vmem>>, vector<1x32x32xf32>
      %30 = vector.shape_cast %29 : vector<1x32x32xf32> to vector<32x32xf32>
      %31 = vector.shape_cast %28 : vector<32x32xf32> to vector<1x32x32xf32>
      tpu.vector_store %arg4[%c0_12, %c0_13, %c0_14], %31 {strides = array<i32>} : memref<1x32x32xf32, #tpu.memory_space<vmem>>, vector<1x32x32xf32>,
      %c0_15 = arith.constant 0 : index
      %c0_16 = arith.constant 0 : index
      %c0_17 = arith.constant 0 : index
      %32 = vector.load %arg5[%c0_15, %c0_16, %c0_17] : memref<1x1x32xf32, #tpu.memory_space<vmem>>, vector<1x1x32xf32>
      %33 = vector.shape_cast %32 : vector<1x1x32xf32> to vector<1x32xf32>
      %34 = arith.addf %33, %19 : vector<1x32xf32>
      %c0_18 = arith.constant 0 : index
      %c0_19 = arith.constant 0 : index
      %c0_20 = arith.constant 0 : index
      %35 = vector.load %arg5[%c0_18, %c0_19, %c0_20] : memref<1x1x32xf32, #tpu.memory_space<vmem>>, vector<1x1x32xf32>
      %36 = vector.shape_cast %35 : vector<1x1x32xf32> to vector<1x32xf32>
      %37 = vector.shape_cast %34 : vector<1x32xf32> to vector<1x1x32xf32>
      tpu.vector_store %arg5[%c0_18, %c0_19, %c0_20], %37 {strides = array<i32>} : memref<1x1x32xf32, #tpu.memory_space<vmem>>, vector<1x1x32xf32>,
    } else {
    }
    return
  }
  func.func @transform_0(%arg0: i32, %arg1: i32) -> (i32, i32) {
    %c1_i32 = arith.constant 1 : i32
    %0 = arith.muli %arg0, %c1_i32 : i32
    %1 = arith.addi %0, %arg1 : i32
    %c0_i32 = arith.constant 0 : i32
    %2 = arith.minsi %1, %c0_i32 : i32
    %c0_i32_0 = arith.constant 0 : i32
    %c0_i32_1 = arith.constant 0 : i32
    return %2, %c0_i32_0 : i32, i32
  }
  func.func @transform_1(%arg0: i32, %arg1: i32) -> (i32, i32) {
    %c0_i32 = arith.constant 0 : i32
    %c0_i32_0 = arith.constant 0 : i32
    %c0_i32_1 = arith.constant 0 : i32
    return %c0_i32, %c0_i32_0 : i32, i32
  }
  func.func @transform_2(%arg0: i32, %arg1: i32) -> (i32, i32, i32) {
    %c0_i32 = arith.constant 0 : i32
    %c0_i32_0 = arith.constant 0 : i32
    %c0_i32_1 = arith.constant 0 : i32
    return %arg0, %c0_i32, %c0_i32_0 : i32, i32, i32
  }
  func.func @transform_3(%arg0: i32, %arg1: i32) -> (i32, i32, i32) {
    %c0_i32 = arith.constant 0 : i32
    %c0_i32_0 = arith.constant 0 : i32
    %c0_i32_1 = arith.constant 0 : i32
    return %arg0, %c0_i32, %c0_i32_0 : i32, i32, i32
  }
}

</mosaic_0001>

<llo_original>
// kernel: tpu_custom_call.1
$region0: #{tpu_custom_call.1}
  #allocation0 [shape = 'u32[]', space=smem, size = 0x4, offset = 0x4, fixed_abs, tag = 'smem constant byte address 0x4 - core index']
  #allocation1 [shape = 'u32[144,128]{1,0:T(1,128)}', space=vmem, size = 0x12000, scoped, tag = 'internal scratch']
  %s0 = inlined_call_operand.vmem [shape: f32[64,32], index: 0, kind: input, shape index: {}]
  %s1 = inlined_call_operand.vmem [shape: f32[1,32], index: 1, kind: input, shape index: {}]
  %s2 = inlined_call_operand.hbm [shape: f32[1,32,32], index: 2, kind: output, shape index: {0}]
  %s3 = inlined_call_operand.hbm [shape: f32[1,1,32], index: 3, kind: output, shape index: {1}]
  %4 = xla_tuple %s2, %s3
  %s5 = sld [smem:[#allocation0]]
  $region34: #{tpu_custom_call.1} parent=0
    _
  %s7 = ssub.s32 1, %s5
  %s8 = scalar_select 0, %s7, %s5
  $region1: #{tpu_custom_call.1} parent=0
    #allocation2 [shape = 'u8[16384]{0}', space=vmem, size = 0x4000, scoped, tag = 'output window, operand 0, single buffered']
    #allocation3 [shape = 's32[1]{0}', space=sflag, size = 0x4, scoped, tag = 'scoped memory for tpu_custom_call.1']
    #allocation4 [shape = 'u8[512]{0}', space=vmem, size = 0x400, scoped, tag = 'output window, operand 1, single buffered']
    #allocation5 [shape = 's32[1]{0}', space=sflag, size = 0x4, scoped, tag = 'scoped memory for tpu_custom_call.1']
    %9 = vsyncpa [#allocation3], 0
    %10 = vsyncpa [#allocation5], 0
    // Predicated region
    $region2: #{tpu_custom_call.1} parent=1 // pred_check
      _
    $region3: #{tpu_custom_call.1} parent=1 // pred_check_branch
      %12 = sbr.rel (0) target = $region5
    $region4: #{tpu_custom_call.1} parent=1 // pred_region
      %s13 = sadd.s32 0, 0
      %p14 = scmp.lt.s32.totalorder %s13, 0
      %s15 = scalar_select %p14, %s13, 0
      %s16 = smul.u32 8, %s15
      %p17 = scmp.lt.s32.totalorder %s16, 7
      %s18 = scalar_select %p17, %s16, 7
      %s19 = smul.addr %s18, 8
      %s20 = scalar_lea.vmem %s0, %s19
      %s21 = sadd.s32 0, 0
      %p22 = scmp.lt.s32.totalorder %s21, 0
      %s23 = scalar_select %p22, %s21, 0
      %s24 = smul.u32 8, %s23
    $region5: #{tpu_custom_call.1} parent=1 // pred_fallthru
      _
    // Predicated region
    $region6: #{tpu_custom_call.1} parent=1 // pred_check
      _
    $region7: #{tpu_custom_call.1} parent=1 // pred_check_branch
      %26 = sbr.rel (0) target = $region9
    $region8: #{tpu_custom_call.1} parent=1 // pred_region
      _
    $region9: #{tpu_custom_call.1} parent=1 // pred_fallthru
      _
    %s27 = sadd.s32 0, 0
    %p28 = scmp.lt.s32.totalorder %s27, 0
    %s29 = scalar_select %p28, %s27, 0
    %s30 = smul.u32 8, %s29
    %p31 = scmp.lt.s32.totalorder %s30, 7
    %s32 = scalar_select %p31, %s30, 7
    %s33 = smul.addr %s32, 8
    %s34 = scalar_lea.vmem %s0, %s33
    %s35 = sadd.s32 0, 0
    %p36 = scmp.lt.s32.totalorder %s35, 0
    %s37 = scalar_select %p36, %s35, 0
    %s38 = smul.u32 8, %s37
    %p39 = scmp.lt.s32.totalorder %s38, 7
    %s40 = scalar_select %p39, %s38, 7
    %s41 = smul.addr %s40, 8
    %s42 = scalar_lea.vmem %s0, %s41
    %s43 = sadd.s32 0, 0
    %p44 = scmp.lt.s32.totalorder %s43, 0
    %s45 = scalar_select %p44, %s43, 0
    %s46 = smul.u32 8, %s45
    %s47 = sadd.s32 0, 0
    %s48 = smul.u32 %s47, 64
    %v49 = vlaneseq
    %v50 = vshrl.u32 %v49, 7
    %v51 = vadd.s32 %v50, 8
    %v52 = vadd.s32 %v50, 16
    %v53 = vadd.s32 %v50, 24
    %v54 = vadd.s32 %v50, 32
    %v55 = vadd.s32 %v50, 40
    %v56 = vadd.s32 %v50, 48
    %v57 = vadd.s32 %v50, 56
    %v58 = vstv %s48
    %v59 = vadd.s32 %v58, %v50
    %v60 = vadd.s32 %v58, %v51
    %v61 = vadd.s32 %v58, %v52
    %v62 = vadd.s32 %v58, %v53
    %v63 = vadd.s32 %v58, %v54
    %v64 = vadd.s32 %v58, %v55
    %v65 = vadd.s32 %v58, %v56
    %v66 = vadd.s32 %v58, %v57
    %vm67 = vcmp.lt.s32.totalorder %v59, 64
    %vm68 = vcmp.lt.s32.totalorder %v60, 64
    %vm69 = vcmp.lt.s32.totalorder %v61, 64
    %vm70 = vcmp.lt.s32.totalorder %v62, 64
    %vm71 = vcmp.lt.s32.totalorder %v63, 64
    %vm72 = vcmp.lt.s32.totalorder %v64, 64
    %vm73 = vcmp.lt.s32.totalorder %v65, 64
    %vm74 = vcmp.lt.s32.totalorder %v66, 64
    %v75 = vld [vmem:[%s42] sm:$0xff]
    %v76 = vld [vmem:[%s42 + $0x8] sm:$0xff]
    %v77 = vld [vmem:[%s42 + $0x10] sm:$0xff]
    %v78 = vld [vmem:[%s42 + $0x18] sm:$0xff]
    %v79 = vld [vmem:[%s42 + $0x20] sm:$0xff]
    %v80 = vld [vmem:[%s42 + $0x28] sm:$0xff]
    %v81 = vld [vmem:[%s42 + $0x30] sm:$0xff]
    %v82 = vld [vmem:[%s42 + $0x38] sm:$0xff]
    %v83 = vld [vmem:[%s1] sm:$0x1]
    %v85 = vlaneseq
    %v86 = vshrl.u32 %v85, 7
    %v87 = vsub.s32 0, %v86
    %v88 = vrot.slane %v83, %v87
    %v90 = vsub.f32 %v75, %v88
    %v91 = vsub.f32 %v76, %v88
    %v92 = vsub.f32 %v77, %v88
    %v93 = vsub.f32 %v78, %v88
    %v94 = vsub.f32 %v79, %v88
    %v95 = vsub.f32 %v80, %v88
    %v96 = vsub.f32 %v81, %v88
    %v97 = vsub.f32 %v82, %v88
    %v98 = vsel %vm67, 1, 0
    %v99 = vsel %vm68, 1, 0
    %v100 = vsel %vm69, 1, 0
    %v101 = vsel %vm70, 1, 0
    %v102 = vsel %vm71, 1, 0
    %v103 = vsel %vm72, 1, 0
    %v104 = vsel %vm73, 1, 0
    %v105 = vsel %vm74, 1, 0
    %vm106 = vcmp.eq.s32.totalorder %v98, 1
    %vm107 = vcmp.eq.s32.totalorder %v99, 1
    %vm108 = vcmp.eq.s32.totalorder %v100, 1
    %vm109 = vcmp.eq.s32.totalorder %v101, 1
    %vm110 = vcmp.eq.s32.totalorder %v102, 1
    %vm111 = vcmp.eq.s32.totalorder %v103, 1
    %vm112 = vcmp.eq.s32.totalorder %v104, 1
    %vm113 = vcmp.eq.s32.totalorder %v105, 1
    %v114 = vsel %vm106, %v90, 0.0
    %v115 = vsel %vm107, %v91, 0.0
    %v116 = vsel %vm108, %v92, 0.0
    %v117 = vsel %vm109, %v93, 0.0
    %v118 = vsel %vm110, %v94, 0.0
    %v119 = vsel %vm111, %v95, 0.0
    %v120 = vsel %vm112, %v96, 0.0
    %v121 = vsel %vm113, %v97, 0.0
    %122 = vxpose.xlu0.b32.start [1/16] %v114, 128
    %123 = vxpose.xlu0.b32.cont [2/16] %v115, 128
    %124 = vxpose.xlu0.b32.cont [3/16] %v116, 128
    %125 = vxpose.xlu0.b32.cont [4/16] %v117, 128
    %126 = vxpose.xlu0.b32.cont [5/16] %v118, 128
    %127 = vxpose.xlu0.b32.cont [6/16] %v119, 128
    %128 = vxpose.xlu0.b32.cont [7/16] %v120, 128
    %129 = vxpose.xlu0.b32.cont [8/16] %v121, 128
    %130 = vxpose.xlu0.b32.cont [9/16] 0.0, 128
    %131 = vxpose.xlu0.b32.cont [10/16] 0.0, 128
    %132 = vxpose.xlu0.b32.cont [11/16] 0.0, 128
    %133 = vxpose.xlu0.b32.cont [12/16] 0.0, 128
    %134 = vxpose.xlu0.b32.cont [13/16] 0.0, 128
    %135 = vxpose.xlu0.b32.cont [14/16] 0.0, 128
    %136 = vxpose.xlu0.b32.cont [15/16] 0.0, 128
    %137 = vxpose.xlu0.b32.end [16/16] 0.0, 128
    %v138 = vpop.trf.xlu0
    %v139 = vpop.trf.xlu0
    %v140 = vpop.trf.xlu0
    %v141 = vpop.trf.xlu0
    %v142 = vpop.trf.xlu0
    %v143 = vpop.trf.xlu0
    %v144 = vpop.trf.xlu0
    %v145 = vpop.trf.xlu0
    %v146 = vpop.trf.xlu0
    %v147 = vpop.trf.xlu0
    %v148 = vpop.trf.xlu0
    %v149 = vpop.trf.xlu0
    %v150 = vpop.trf.xlu0
    %v151 = vpop.trf.xlu0
    %v152 = vpop.trf.xlu0
    %v153 = vpop.trf.xlu0
    %vm154 = vcmask 523264
    %v156 = vsel %vm154, %v138, 0
    %v159 = vsel %vm154, %v139, 0
    %v162 = vsel %vm154, %v140, 0
    %v165 = vsel %vm154, %v141, 0
    %167 = vmatprep.subr.mxu0 0.0
    %168 = vmatpush1.msra.mxu0 %v114
    %169 = vmatprep.subr.mxu0 0.0
    %170 = vmatpush1.msra.mxu0 %v115
    %171 = vmatprep.subr.mxu0 0.0
    %172 = vmatpush1.msra.mxu0 %v116
    %173 = vmatprep.subr.mxu0 0.0
    %174 = vmatpush1.msra.mxu0 %v117
    %175 = vmatprep.subr.mxu0 0.0
    %176 = vmatpush1.msra.mxu0 %v118
    %177 = vmatprep.subr.mxu0 0.0
    %178 = vmatpush1.msra.mxu0 %v119
    %179 = vmatprep.subr.mxu0 0.0
    %180 = vmatpush1.msra.mxu0 %v120
    %181 = vmatprep.subr.mxu0 0.0
    %182 = vmatpush1.msra.mxu0 %v121
    %183 = vmatprep.subr.mxu0 0.0
    %184 = vmatpush1.msra.mxu0 0.0
    %185 = vmatprep.subr.mxu0 0.0
    %186 = vmatpush1.msra.mxu0 0.0
    %187 = vmatprep.subr.mxu0 0.0
    %188 = vmatpush1.msra.mxu0 0.0
    %189 = vmatprep.subr.mxu0 0.0
    %190 = vmatpush1.msra.mxu0 0.0
    %191 = vmatprep.subr.mxu0 0.0
    %192 = vmatpush1.msra.mxu0 0.0
    %193 = vmatprep.subr.mxu0 0.0
    %194 = vmatpush1.msra.mxu0 0.0
    %195 = vmatprep.subr.mxu0 0.0
    %196 = vmatpush1.msra.mxu0 0.0
    %197 = vmatprep.subr.mxu0 0.0
    %198 = vmatpush1.msra.mxu0 0.0
    %199 = vmatprep.subr.mxu0 0.0
    %200 = vmatpush1.msra.mxu0 0.0
    %201 = vmatprep.subr.mxu0 0.0
    %202 = vmatpush1.msra.mxu0 0.0
    %203 = vmatprep.subr.mxu0 0.0
    %204 = vmatpush1.msra.mxu0 0.0
    %205 = vmatprep.subr.mxu0 0.0
    %206 = vmatpush1.msra.mxu0 0.0
    %207 = vmatprep.subr.mxu0 0.0
    %208 = vmatpush1.msra.mxu0 0.0
    %209 = vmatprep.subr.mxu0 0.0
    %210 = vmatpush1.msra.mxu0 0.0
    %211 = vmatprep.subr.mxu0 0.0
    %212 = vmatpush1.msra.mxu0 0.0
    %213 = vmatprep.subr.mxu0 0.0
    %214 = vmatpush1.msra.mxu0 0.0
    %215 = vmatprep.subr.mxu0 0.0
    %216 = vmatpush1.msra.mxu0 0.0
    %217 = vmatprep.subr.mxu0 0.0
    %218 = vmatpush1.msra.mxu0 0.0
    %219 = vmatprep.subr.mxu0 0.0
    %220 = vmatpush1.msra.mxu0 0.0
    %221 = vmatprep.subr.mxu0 0.0
    %222 = vmatpush1.msra.mxu0 0.0
    %223 = vmatprep.subr.mxu0 0.0
    %224 = vmatpush1.msra.mxu0 0.0
    %225 = vmatprep.subr.mxu0 0.0
    %226 = vmatpush1.msra.mxu0 0.0
    %227 = vmatprep.subr.mxu0 0.0
    %228 = vmatpush1.msra.mxu0 0.0
    %229 = vmatprep.subr.mxu0 0.0
    %230 = vmatpush1.msra.mxu0 0.0
    %231 = vmatprep.mubr.f32.mxu0 0.0
    %232 = vmatmul.mubr.f32.gmra.mrb[0].mxu0 %v156
    %v233 = vpop.f32.mrb[0].mxu0
    %v234 = vadd.f32 0.0, %v233
    %v235 = vpop.f32.mrb[0].mxu0
    %236 = vmatprep.mubr.f32.mxu0 0.0
    %237 = vmatmul.mubr.f32.gmra.mrb[0].mxu0 %v159
    %v238 = vpop.f32.mrb[0].mxu0
    %v239 = vadd.f32 0.0, %v238
    %v240 = vpop.f32.mrb[0].mxu0
    %241 = vmatprep.mubr.f32.mxu0 0.0
    %242 = vmatmul.mubr.f32.gmra.mrb[0].mxu0 %v162
    %v243 = vpop.f32.mrb[0].mxu0
    %v244 = vadd.f32 0.0, %v243
    %v245 = vpop.f32.mrb[0].mxu0
    %246 = vmatprep.mubr.f32.mxu0 0.0
    %247 = vmatmul.mubr.f32.gmra.mrb[0].mxu0 %v165
    %v248 = vpop.f32.mrb[0].mxu0
    %v249 = vadd.f32 0.0, %v248
    %v250 = vpop.f32.mrb[0].mxu0
    %251 = vdwg.mxu0
    %vm252 = vcmask 261120
    %v253 = vsel %vm252, %v114, 0.0
    %v254 = vsel %vm252, %v115, 0.0
    %v255 = vadd.f32 %v253, %v254
    %v256 = vsel %vm252, %v116, 0.0
    %v257 = vadd.f32 %v255, %v256
    %v258 = vsel %vm252, %v117, 0.0
    %v259 = vadd.f32 %v257, %v258
    %v260 = vsel %vm252, %v118, 0.0
    %v261 = vadd.f32 %v259, %v260
    %v262 = vsel %vm252, %v119, 0.0
    %v263 = vadd.f32 %v261, %v262
    %v264 = vsel %vm252, %v120, 0.0
    %v265 = vadd.f32 %v263, %v264
    %v266 = vsel %vm252, %v121, 0.0
    %v267 = vadd.f32 %v265, %v266
    %v268 = vrot.slane %v267, 4
    %v269 = vadd.f32 %v267, %v268
    %v270 = vrot.slane %v269, 2
    %v271 = vadd.f32 %v269, %v270
    %v272 = vrot.slane %v271, 1
    %v273 = vadd.f32 %v271, %v272
    %p274 = scmp.eq.s32.totalorder 0, 0
    // Predicated region
    $region10: #{tpu_custom_call.1} parent=1 // pred_check
      %p275 = pneg %p274
    $region11: #{tpu_custom_call.1} parent=1 // pred_check_branch
      %277 = sbr.rel (%p275) target = $region13
    $region12: #{tpu_custom_call.1} parent=1 // pred_region
      %278 = vst.msk [vmem:[#allocation2] sm:$0xff] %vm252, %v234
      %279 = vst.msk [vmem:[#allocation2 + $0x8] sm:$0xff] %vm252, %v239
      %280 = vst.msk [vmem:[#allocation2 + $0x10] sm:$0xff] %vm252, %v244
      %281 = vst.msk [vmem:[#allocation2 + $0x18] sm:$0xff] %vm252, %v249
      %vm282 = vcmask 253952
      %283 = vst.msk [vmem:[#allocation4] sm:$0x1] %vm282, %v273
    $region13: #{tpu_custom_call.1} parent=1 // pred_fallthru
      _
    %p284 = scmp.ne.s32.totalorder 0, 0
    // Predicated region
    $region14: #{tpu_custom_call.1} parent=1 // pred_check
      %p285 = pneg %p284
    $region15: #{tpu_custom_call.1} parent=1 // pred_check_branch
      %287 = sbr.rel (%p285) target = $region17
    $region16: #{tpu_custom_call.1} parent=1 // pred_region
      %v288 = vld [vmem:[#allocation2] sm:$0xff]
      %v289 = vld [vmem:[#allocation2 + $0x8] sm:$0xff]
      %v290 = vld [vmem:[#allocation2 + $0x10] sm:$0xff]
      %v291 = vld [vmem:[#allocation2 + $0x18] sm:$0xff]
      %v292 = vadd.f32 %v288, %v234
      %v293 = vadd.f32 %v289, %v239
      %v294 = vadd.f32 %v290, %v244
      %v295 = vadd.f32 %v291, %v249
      %296 = vst.msk [vmem:[#allocation2] sm:$0xff] %vm252, %v292
      %297 = vst.msk [vmem:[#allocation2 + $0x8] sm:$0xff] %vm252, %v293
      %298 = vst.msk [vmem:[#allocation2 + $0x10] sm:$0xff] %vm252, %v294
      %299 = vst.msk [vmem:[#allocation2 + $0x18] sm:$0xff] %vm252, %v295
      %v300 = vld [vmem:[#allocation4] sm:$0x1]
      %v301 = vadd.f32 %v300, %v273
      %vm302 = vcmask 253952
      %303 = vst.msk [vmem:[#allocation4] sm:$0x1] %vm302, %v301
    $region17: #{tpu_custom_call.1} parent=1 // pred_fallthru
      _
    // Predicated region
    $region18: #{tpu_custom_call.1} parent=1 // pred_check
      _
    $region19: #{tpu_custom_call.1} parent=1 // pred_check_branch
      %305 = sbr.rel (0) target = $region21
    $region20: #{tpu_custom_call.1} parent=1 // pred_region
      %s307 = ssub.s32 512, 512
      %308 = vsyncadd [#allocation3], %s307
      %s309 = sshll.u32 [#allocation2], 4
      %s310 = int_to_ptr.vmem [resolvable:$true] %s309
      %315 = dma.vmem_to_hbm [thread:$0]  %s310, 512, %s2, [#allocation3], 128, 128, 8
    $region21: #{tpu_custom_call.1} parent=1 // pred_fallthru
      _
    // Predicated region
    $region22: #{tpu_custom_call.1} parent=1 // pred_check
      _
    $region23: #{tpu_custom_call.1} parent=1 // pred_check_branch
      %317 = sbr.rel (0) target = $region25
    $region24: #{tpu_custom_call.1} parent=1 // pred_region
      %s319 = ssub.s32 16, 16
      %320 = vsyncadd [#allocation5], %s319
      %s322 = sshll.u32 [#allocation4], 4
      %s323 = int_to_ptr.vmem [resolvable:$true] %s322
      %325 = dma.vmem_to_hbm [thread:$0]  %s323, 16, %s3, [#allocation5]
    $region25: #{tpu_custom_call.1} parent=1 // pred_fallthru
      _
    // Predicated region
    $region26: #{tpu_custom_call.1} parent=1 // pred_check
      _
    $region27: #{tpu_custom_call.1} parent=1 // pred_check_branch
      %327 = sbr.rel (0) target = $region29
    $region28: #{tpu_custom_call.1} parent=1 // pred_region
      %328 = dma.done [#allocation3], 512
    $region29: #{tpu_custom_call.1} parent=1 // pred_fallthru
      _
    // Predicated region
    $region30: #{tpu_custom_call.1} parent=1 // pred_check
      _
    $region31: #{tpu_custom_call.1} parent=1 // pred_check_branch
      %330 = sbr.rel (0) target = $region33
    $region32: #{tpu_custom_call.1} parent=1 // pred_region
      %331 = dma.done [#allocation5], 16
    $region33: #{tpu_custom_call.1} parent=1 // pred_fallthru
      _
    %332 = vsyncpa [#allocation3], 1
    %333 = vsyncpa [#allocation5], 1

</llo_original>
